<compile_context>
chip_gen: v7x
topology: tpu7x:2x2x1
jax: 0.10.0
libtpu: 0.0.40
codegen_flags: <defaults>
</compile_context>

<pallas_src>
import functools

import jax
import jax.numpy as jnp
from jax.experimental import pallas as pl
from jax.experimental.pallas import tpu as pltpu

BN_EPS = 1e-5
PAD = 128  # lane-padded width for all hidden layers and the output


def _dqn_kernel(x_ref, w1_ref, w2_ref, w3_ref, ws1_ref, wout_ref, bias_ref,
                q_ref, *, compute_dtype):
    b = bias_ref[...]  # (8, PAD) f32 bias slab, rows 0..4 used
    cdt = compute_dtype

    # fc1 (+ folded BatchNorm) -> ReLU              (padded cols 64.. stay 0)
    h = jnp.dot(x_ref[...].astype(cdt), w1_ref[...],
                preferred_element_type=jnp.float32) + b[0:1, :]
    h = jnp.maximum(h, 0.0)

    # fc2 -> ReLU   (dropout == identity in eval mode)
    h = jnp.dot(h.astype(cdt), w2_ref[...],
                preferred_element_type=jnp.float32) + b[1:2, :]
    h = jnp.maximum(h, 0.0)

    # fc3 -> ReLU
    h = jnp.dot(h.astype(cdt), w3_ref[...],
                preferred_element_type=jnp.float32) + b[2:3, :]
    h = jnp.maximum(h, 0.0)

    # fused value/advantage hidden: cols 0..15 = value stream, 16..31 = advantage
    s = jnp.dot(h.astype(cdt), ws1_ref[...],
                preferred_element_type=jnp.float32) + b[3:4, :]
    s = jnp.maximum(s, 0.0)

    # fused output with the dueling combine already folded into the weights/bias:
    # out[:, j] = V + A_j - mean_k(A_k) for j < action_size, exactly 0 otherwise.
    out = jnp.dot(s.astype(cdt), wout_ref[...],
                  preferred_element_type=jnp.float32) + b[4:5, :]
    q_ref[...] = out.astype(q_ref.dtype)


def _round_up(n, m):
    return (n + m - 1) // m * m


def pack_params(params, *, compute_dtype=jnp.bfloat16):
    """Fold BN into fc1, fuse the two streams + dueling combine, pad to 128 lanes.

    Call ONCE per parameter set; reuse the result across forward calls.
    """
    f32 = jnp.float32
    action_size = params["wa2"].shape[1]
    state_size = params["w1"].shape[0]
    assert action_size <= PAD, "fused output packing requires action_size <= 128"
    state_p = _round_up(state_size, 8)

    # Fold eval-mode BatchNorm1d into fc1.
    scale = params["gamma"] * jax.lax.rsqrt(params["rvar"] + BN_EPS)   # (1, 64)
    w1f = params["w1"] * scale                                         # (S, 64)
    b1f = (params["b1"] - params["rmean"]) * scale + params["beta"]    # (1, 64)

    w1p = jnp.zeros((state_p, PAD), f32).at[:state_size, :64].set(w1f)
    w2p = jnp.zeros((PAD, PAD), f32).at[:64, :64].set(params["w2"])
    w3p = jnp.zeros((PAD, PAD), f32).at[:64, :32].set(params["w3"])
    ws1p = (jnp.zeros((PAD, PAD), f32)
            .at[:32, 0:16].set(params["wv1"])
            .at[:32, 16:32].set(params["wa1"]))

    # Fold the dueling combine (Q = V + A - mean(A)) into the output layer:
    #   rows 16:32 carry (wa2 - rowwise mean over actions), rows 0:16 carry wv2
    #   broadcast to every action column; bias = ba2 - mean(ba2) + bv2.
    wa2c = params["wa2"] - jnp.mean(params["wa2"], axis=1, keepdims=True)   # (16, A)
    wv2b = jnp.broadcast_to(params["wv2"], (16, action_size))              # (16, A)
    woutp = (jnp.zeros((PAD, PAD), f32)
             .at[0:16, :action_size].set(wv2b)
             .at[16:32, :action_size].set(wa2c))
    bout = params["ba2"][0] - jnp.mean(params["ba2"]) + params["bv2"][0, 0]

    bias = (jnp.zeros((8, PAD), f32)
            .at[0, :64].set(b1f[0])
            .at[1, :64].set(params["b2"][0])
            .at[2, :32].set(params["b3"][0])
            .at[3, 0:16].set(params["bv1"][0])
            .at[3, 16:32].set(params["ba1"][0])
            .at[4, :action_size].set(bout))

    weights = tuple(w.astype(compute_dtype) for w in (w1p, w2p, w3p, ws1p, woutp))
    return {"weights": weights, "bias": bias,
            "action_size": int(action_size), "state_size": int(state_size),
            "state_padded": int(state_p), "compute_dtype": compute_dtype}


def dqn_forward(x, packed, *, tile_b_max=2048, out_dtype=jnp.float32):
    """Dueling DQN forward pass (eval mode) in one batch-tiled Pallas call."""
    if x.ndim == 1:
        x = x[None, :]
    x = x.astype(jnp.float32)
    batch, state_size = x.shape
    assert state_size == packed["state_size"]

    state_p = packed["state_padded"]
    action_size = packed["action_size"]
    w1p, w2p, w3p, ws1p, woutp = packed["weights"]
    bias = packed["bias"]

    # Prefer >= 2 grid steps at larger batches so ("parallel",) can shard the grid
    # across both TensorCores on v7x; cap the tile so it stays well inside the
    # default scoped VMEM on every generation (v5e 16 MiB, v6e/v7x 32 MiB).
    tile_b = min(tile_b_max, max(8, _round_up(pl.cdiv(batch, 2), 8)))
    batch_p = _round_up(batch, tile_b)
    x_p = jnp.zeros((batch_p, state_p), jnp.float32).at[:batch, :state_size].set(x)

    grid = (batch_p // tile_b,)
    resident = lambda i: (0, 0)   # weights stay VMEM-resident across grid steps
    in_specs = [
        pl.BlockSpec((tile_b, state_p), lambda i: (i, 0)),  # x tile (pipelined)
        pl.BlockSpec((state_p, PAD), resident),             # w1 (BN folded), bf16
        pl.BlockSpec((PAD, PAD), resident),                 # w2
        pl.BlockSpec((PAD, PAD), resident),                 # w3
        pl.BlockSpec((PAD, PAD), resident),                 # fused stream layer 1
        pl.BlockSpec((PAD, PAD), resident),                 # fused output (dueling folded)
        pl.BlockSpec((8, PAD), resident),                   # packed biases (f32)
    ]
    out_specs = pl.BlockSpec((tile_b, PAD), lambda i: (i, 0))

    q_padded = pl.pallas_call(
        functools.partial(_dqn_kernel, compute_dtype=packed["compute_dtype"]),
        out_shape=jax.ShapeDtypeStruct((batch_p, PAD), out_dtype),
        grid=grid,
        in_specs=in_specs,
        out_specs=out_specs,
        compiler_params=pltpu.CompilerParams(
            dimension_semantics=("parallel",)),
    )(x_p, w1p, w2p, w3p, ws1p, woutp, bias)

    # NOTE: padded batch rows / lanes carry garbage-free zeros but are not valid
    # Q-values; keep this slice (or an equivalent mask) in any fused consumer.
    return q_padded[:batch, :action_size]


def init_params(key, state_size, action_size):
    """Deterministic parameter init (weights as (in, out), biases as (1, out))."""
    def linear(k, fan_in, fan_out):
        kw, kb = jax.random.split(k)
        bound = 1.0 / jnp.sqrt(float(fan_in))
        w = jax.random.uniform(kw, (fan_in, fan_out), jnp.float32, -bound, bound)
        b = jax.random.uniform(kb, (1, fan_out), jnp.float32, -bound, bound)
        return w, b

    keys = jax.random.split(key, 7)
    w1, b1 = linear(keys[0], state_size, 64)
    w2, b2 = linear(keys[1], 64, 64)
    w3, b3 = linear(keys[2], 64, 32)
    wv1, bv1 = linear(keys[3], 32, 16)
    wv2, bv2 = linear(keys[4], 16, 1)
    wa1, ba1 = linear(keys[5], 32, 16)
    wa2, ba2 = linear(keys[6], 16, action_size)

    return {
        "w1": w1, "b1": b1,
        # BatchNorm1d(64) defaults: gamma=1, beta=0, running_mean=0, running_var=1
        "gamma": jnp.ones((1, 64), jnp.float32),
        "beta": jnp.zeros((1, 64), jnp.float32),
        "rmean": jnp.zeros((1, 64), jnp.float32),
        "rvar": jnp.ones((1, 64), jnp.float32),
        "w2": w2, "b2": b2,
        "w3": w3, "b3": b3,
        "wv1": wv1, "bv1": bv1, "wv2": wv2, "bv2": bv2,
        "wa1": wa1, "ba1": ba1, "wa2": wa2, "ba2": ba2,
    }


def dqn_reference(x, p, compute_dtype=None):
    """Pure-JAX reference (eval mode). If compute_dtype is set, matmul operands
    are cast to it (f32 accumulation), mirroring the kernel's bf16 MXU path."""
    if x.ndim == 1:
        x = x[None, :]

    def mm(a, w):
        if compute_dtype is not None:
            a = a.astype(compute_dtype)
            w = w.astype(compute_dtype)
        return jnp.dot(a, w, preferred_element_type=jnp.float32)

    h = mm(x, p["w1"]) + p["b1"]
    h = (h - p["rmean"]) / jnp.sqrt(p["rvar"] + BN_EPS) * p["gamma"] + p["beta"]
    h = jnp.maximum(h, 0.0)
    h = jnp.maximum(mm(h, p["w2"]) + p["b2"], 0.0)
    h = jnp.maximum(mm(h, p["w3"]) + p["b3"], 0.0)
    v = mm(jnp.maximum(mm(h, p["wv1"]) + p["bv1"], 0.0), p["wv2"]) + p["bv2"]
    a = mm(jnp.maximum(mm(h, p["wa1"]) + p["ba1"], 0.0), p["wa2"]) + p["ba2"]
    return v + (a - jnp.mean(a, axis=1, keepdims=True))


if __name__ == "__main__":
    state_size = 8
    action_size = 4
    batch = 2

    key = jax.random.PRNGKey(0)
    key_x, key_p = jax.random.split(key)
    x = jax.random.normal(key_x, (batch, state_size), dtype=jnp.float32)
    params = init_params(key_p, state_size, action_size)

    packed = pack_params(params)          # pack / fold ONCE, reuse per forward
    q = dqn_forward(x, packed)
    q = jax.block_until_ready(q)

    assert q.shape == (batch, action_size)
    # Tight check vs a reference that matches the kernel's bf16 matmul operands.
    q_ref_bf16 = dqn_reference(x, params, compute_dtype=jnp.bfloat16)
    assert jnp.allclose(q, q_ref_bf16, atol=1e-2, rtol=1e-2), \
        "mismatch vs bf16-operand JAX reference"
    # Looser sanity check vs the pure-f32 reference (bf16 operand rounding noise).
    q_ref_f32 = dqn_reference(x, params)
    assert jnp.allclose(q, q_ref_f32, atol=2e-2, rtol=2e-2), \
        "mismatch vs f32 JAX reference"

    print("KERNEL_OK")
</pallas_src>

<mosaic_0001>
module attributes {stable_mosaic.version = 11 : i64} {
  func.func @_dqn_kernel(%arg0: i32, %arg1: memref<8x8xf32, #tpu.memory_space<vmem>>, %arg2: memref<8x128xbf16, #tpu.memory_space<vmem>>, %arg3: memref<128x128xbf16, #tpu.memory_space<vmem>>, %arg4: memref<128x128xbf16, #tpu.memory_space<vmem>>, %arg5: memref<128x128xbf16, #tpu.memory_space<vmem>>, %arg6: memref<128x128xbf16, #tpu.memory_space<vmem>>, %arg7: memref<8x128xf32, #tpu.memory_space<vmem>>, %arg8: memref<8x128xf32, #tpu.memory_space<vmem>>) attributes {dimension_semantics = [#tpu.dimension_semantics<parallel>], iteration_bounds = array<i64: 1>, scalar_prefetch = 0 : i64, scratch_operands = 0 : i64, tpu.core_type = #tpu.core_type<tc>, window_params = [{transform_indices = @transform_0, window_bounds = array<i64: 8, 8>}, {pipeline_mode = #tpu.pipeline_mode<synchronous>, transform_indices = @transform_1, window_bounds = array<i64: 8, 128>}, {pipeline_mode = #tpu.pipeline_mode<synchronous>, transform_indices = @transform_2, window_bounds = array<i64: 128, 128>}, {pipeline_mode = #tpu.pipeline_mode<synchronous>, transform_indices = @transform_3, window_bounds = array<i64: 128, 128>}, {pipeline_mode = #tpu.pipeline_mode<synchronous>, transform_indices = @transform_4, window_bounds = array<i64: 128, 128>}, {pipeline_mode = #tpu.pipeline_mode<synchronous>, transform_indices = @transform_5, window_bounds = array<i64: 128, 128>}, {pipeline_mode = #tpu.pipeline_mode<synchronous>, transform_indices = @transform_6, window_bounds = array<i64: 8, 128>}, {transform_indices = @transform_7, window_bounds = array<i64: 8, 128>}]} {
    %c0 = arith.constant 0 : index
    %c0_0 = arith.constant 0 : index
    %0 = vector.load %arg7[%c0, %c0_0] : memref<8x128xf32, #tpu.memory_space<vmem>>, vector<8x128xf32>
    %c0_1 = arith.constant 0 : index
    %c0_2 = arith.constant 0 : index
    %1 = vector.load %arg1[%c0_1, %c0_2] : memref<8x8xf32, #tpu.memory_space<vmem>>, vector<8x8xf32>
    %2 = arith.truncf %1 : vector<8x8xf32> to vector<8x8xbf16>
    %c0_3 = arith.constant 0 : index
    %c0_4 = arith.constant 0 : index
    %3 = vector.load %arg2[%c0_3, %c0_4] : memref<8x128xbf16, #tpu.memory_space<vmem>>, vector<8x128xbf16>
    %cst = arith.constant dense<0.000000e+00> : vector<8x128xf32>
    %4 = tpu.matmul %2, %3, %cst {dimension_numbers = #tpu.dot_dimension_numbers<[1], [0], [0], [1], [0, 0, 1, 1], [], []>} : vector<8x8xbf16>, vector<8x128xbf16>, vector<8x128xf32> -> vector<8x128xf32>
    %5 = vector.extract_strided_slice %0 {offsets = [0, 0], sizes = [1, 128], strides = [1, 1]} : vector<8x128xf32> to vector<1x128xf32>
    %6 = vector.broadcast %5 : vector<1x128xf32> to vector<8x128xf32>
    %7 = arith.addf %4, %6 : vector<8x128xf32>
    %cst_5 = arith.constant 0.000000e+00 : f32
    %8 = vector.broadcast %cst_5 : f32 to vector<8x128xf32>
    %9 = arith.maximumf %7, %8 : vector<8x128xf32>
    %10 = arith.truncf %9 : vector<8x128xf32> to vector<8x128xbf16>
    %c0_6 = arith.constant 0 : index
    %c0_7 = arith.constant 0 : index
    %11 = vector.load %arg3[%c0_6, %c0_7] : memref<128x128xbf16, #tpu.memory_space<vmem>>, vector<128x128xbf16>
    %cst_8 = arith.constant dense<0.000000e+00> : vector<8x128xf32>
    %12 = tpu.matmul %10, %11, %cst_8 {dimension_numbers = #tpu.dot_dimension_numbers<[1], [0], [0], [1], [0, 0, 1, 1], [], []>} : vector<8x128xbf16>, vector<128x128xbf16>, vector<8x128xf32> -> vector<8x128xf32>
    %13 = vector.extract_strided_slice %0 {offsets = [1, 0], sizes = [1, 128], strides = [1, 1]} : vector<8x128xf32> to vector<1x128xf32>
    %14 = vector.broadcast %13 : vector<1x128xf32> to vector<8x128xf32>
    %15 = arith.addf %12, %14 : vector<8x128xf32>
    %cst_9 = arith.constant 0.000000e+00 : f32
    %16 = vector.broadcast %cst_9 : f32 to vector<8x128xf32>
    %17 = arith.maximumf %15, %16 : vector<8x128xf32>
    %18 = arith.truncf %17 : vector<8x128xf32> to vector<8x128xbf16>
    %c0_10 = arith.constant 0 : index
    %c0_11 = arith.constant 0 : index
    %19 = vector.load %arg4[%c0_10, %c0_11] : memref<128x128xbf16, #tpu.memory_space<vmem>>, vector<128x128xbf16>
    %cst_12 = arith.constant dense<0.000000e+00> : vector<8x128xf32>
    %20 = tpu.matmul %18, %19, %cst_12 {dimension_numbers = #tpu.dot_dimension_numbers<[1], [0], [0], [1], [0, 0, 1, 1], [], []>} : vector<8x128xbf16>, vector<128x128xbf16>, vector<8x128xf32> -> vector<8x128xf32>
    %21 = vector.extract_strided_slice %0 {offsets = [2, 0], sizes = [1, 128], strides = [1, 1]} : vector<8x128xf32> to vector<1x128xf32>
    %22 = vector.broadcast %21 : vector<1x128xf32> to vector<8x128xf32>
    %23 = arith.addf %20, %22 : vector<8x128xf32>
    %cst_13 = arith.constant 0.000000e+00 : f32
    %24 = vector.broadcast %cst_13 : f32 to vector<8x128xf32>
    %25 = arith.maximumf %23, %24 : vector<8x128xf32>
    %26 = arith.truncf %25 : vector<8x128xf32> to vector<8x128xbf16>
    %c0_14 = arith.constant 0 : index
    %c0_15 = arith.constant 0 : index
    %27 = vector.load %arg5[%c0_14, %c0_15] : memref<128x128xbf16, #tpu.memory_space<vmem>>, vector<128x128xbf16>
    %cst_16 = arith.constant dense<0.000000e+00> : vector<8x128xf32>
    %28 = tpu.matmul %26, %27, %cst_16 {dimension_numbers = #tpu.dot_dimension_numbers<[1], [0], [0], [1], [0, 0, 1, 1], [], []>} : vector<8x128xbf16>, vector<128x128xbf16>, vector<8x128xf32> -> vector<8x128xf32>
    %29 = vector.extract_strided_slice %0 {offsets = [3, 0], sizes = [1, 128], strides = [1, 1]} : vector<8x128xf32> to vector<1x128xf32>
    %30 = vector.broadcast %29 : vector<1x128xf32> to vector<8x128xf32>
    %31 = arith.addf %28, %30 : vector<8x128xf32>
    %cst_17 = arith.constant 0.000000e+00 : f32
    %32 = vector.broadcast %cst_17 : f32 to vector<8x128xf32>
    %33 = arith.maximumf %31, %32 : vector<8x128xf32>
    %34 = arith.truncf %33 : vector<8x128xf32> to vector<8x128xbf16>
    %c0_18 = arith.constant 0 : index
    %c0_19 = arith.constant 0 : index
    %35 = vector.load %arg6[%c0_18, %c0_19] : memref<128x128xbf16, #tpu.memory_space<vmem>>, vector<128x128xbf16>
    %cst_20 = arith.constant dense<0.000000e+00> : vector<8x128xf32>
    %36 = tpu.matmul %34, %35, %cst_20 {dimension_numbers = #tpu.dot_dimension_numbers<[1], [0], [0], [1], [0, 0, 1, 1], [], []>} : vector<8x128xbf16>, vector<128x128xbf16>, vector<8x128xf32> -> vector<8x128xf32>
    %37 = vector.extract_strided_slice %0 {offsets = [4, 0], sizes = [1, 128], strides = [1, 1]} : vector<8x128xf32> to vector<1x128xf32>
    %38 = vector.broadcast %37 : vector<1x128xf32> to vector<8x128xf32>
    %39 = arith.addf %36, %38 : vector<8x128xf32>
    %c0_21 = arith.constant 0 : index
    %c0_22 = arith.constant 0 : index
    %40 = vector.load %arg8[%c0_21, %c0_22] : memref<8x128xf32, #tpu.memory_space<vmem>>, vector<8x128xf32>
    tpu.vector_store %arg8[%c0_21, %c0_22], %39 {strides = array<i32>} : memref<8x128xf32, #tpu.memory_space<vmem>>, vector<8x128xf32>,
    return
  }
  func.func @transform_0(%arg0: i32) -> (i32, i32) {
    %c0_i32 = arith.constant 0 : i32
    %c0_i32_0 = arith.constant 0 : i32
    return %arg0, %c0_i32 : i32, i32
  }
  func.func @transform_1(%arg0: i32) -> (i32, i32) {
    %c0_i32 = arith.constant 0 : i32
    %c0_i32_0 = arith.constant 0 : i32
    %c0_i32_1 = arith.constant 0 : i32
    return %c0_i32, %c0_i32_0 : i32, i32
  }
  func.func @transform_2(%arg0: i32) -> (i32, i32) {
    %c0_i32 = arith.constant 0 : i32
    %c0_i32_0 = arith.constant 0 : i32
    %c0_i32_1 = arith.constant 0 : i32
    return %c0_i32, %c0_i32_0 : i32, i32
  }
  func.func @transform_3(%arg0: i32) -> (i32, i32) {
    %c0_i32 = arith.constant 0 : i32
    %c0_i32_0 = arith.constant 0 : i32
    %c0_i32_1 = arith.constant 0 : i32
    return %c0_i32, %c0_i32_0 : i32, i32
  }
  func.func @transform_4(%arg0: i32) -> (i32, i32) {
    %c0_i32 = arith.constant 0 : i32
    %c0_i32_0 = arith.constant 0 : i32
    %c0_i32_1 = arith.constant 0 : i32
    return %c0_i32, %c0_i32_0 : i32, i32
  }
  func.func @transform_5(%arg0: i32) -> (i32, i32) {
    %c0_i32 = arith.constant 0 : i32
    %c0_i32_0 = arith.constant 0 : i32
    %c0_i32_1 = arith.constant 0 : i32
    return %c0_i32, %c0_i32_0 : i32, i32
  }
  func.func @transform_6(%arg0: i32) -> (i32, i32) {
    %c0_i32 = arith.constant 0 : i32
    %c0_i32_0 = arith.constant 0 : i32
    %c0_i32_1 = arith.constant 0 : i32
    return %c0_i32, %c0_i32_0 : i32, i32
  }
  func.func @transform_7(%arg0: i32) -> (i32, i32) {
    %c0_i32 = arith.constant 0 : i32
    %c0_i32_0 = arith.constant 0 : i32
    return %arg0, %c0_i32 : i32, i32
  }
}

</mosaic_0001>

<llo_original>
// kernel: tpu_custom_call.1
$region0: #{tpu_custom_call.1}
  #allocation0 [shape = 'u32[]', space=smem, size = 0x4, offset = 0x4, fixed_abs, tag = 'smem constant byte address 0x4 - core index']
  #allocation1 [shape = 'u32[144,128]{1,0:T(1,128)}', space=vmem, size = 0x12000, scoped, tag = 'internal scratch']
  %s0 = inlined_call_operand.hbm [shape: f32[8,8], index: 0, kind: input, shape index: {}]
  %s1 = inlined_call_operand.hbm [shape: bf16[8,128], index: 1, kind: input, shape index: {}]
  %s2 = inlined_call_operand.hbm [shape: bf16[128,128], index: 2, kind: input, shape index: {}]
  %s3 = inlined_call_operand.hbm [shape: bf16[128,128], index: 3, kind: input, shape index: {}]
  %s4 = inlined_call_operand.hbm [shape: bf16[128,128], index: 4, kind: input, shape index: {}]
  %s5 = inlined_call_operand.hbm [shape: bf16[128,128], index: 5, kind: input, shape index: {}]
  %s6 = inlined_call_operand.vmem [shape: f32[8,128], index: 6, kind: input, shape index: {}]
  %s7 = inlined_call_operand.hbm [shape: f32[8,128], index: 7, kind: output, shape index: {}]
  %s8 = sld [smem:[#allocation0]]
  $region62: #{tpu_custom_call.1} parent=0
    _
  %s10 = ssub.s32 1, %s8
  %s11 = scalar_select 0, %s10, %s8
  $region1: #{tpu_custom_call.1} parent=0
    #allocation2 [shape = 'u8[4096]{0}', space=vmem, size = 0x1000, scoped, tag = 'input window, operand 0, single buffered']
    #allocation3 [shape = 's32[1]{0}', space=sflag, size = 0x4, scoped, tag = 'scoped memory for tpu_custom_call.1']
    #allocation4 [shape = 's32[1]{0}', space=sflag, size = 0x4, scoped, tag = 'scoped memory for tpu_custom_call.1']
    #allocation5 [shape = 'u8[2048]{0}', space=vmem, size = 0x800, scoped, tag = 'input window, operand 1, single buffered']
    #allocation6 [shape = 's32[1]{0}', space=sflag, size = 0x4, scoped, tag = 'scoped memory for tpu_custom_call.1']
    #allocation7 [shape = 'u8[32768]{0}', space=vmem, size = 0x8000, scoped, tag = 'input window, operand 2, single buffered']
    #allocation8 [shape = 'u8[32768]{0}', space=vmem, size = 0x8000, scoped, tag = 'input window, operand 3, single buffered']
    #allocation9 [shape = 's32[1]{0}', space=sflag, size = 0x4, scoped, tag = 'scoped memory for tpu_custom_call.1']
    #allocation10 [shape = 'u8[32768]{0}', space=vmem, size = 0x8000, scoped, tag = 'input window, operand 4, single buffered']
    #allocation11 [shape = 'u8[32768]{0}', space=vmem, size = 0x8000, scoped, tag = 'input window, operand 5, single buffered']
    #allocation12 [shape = 's32[1]{0}', space=sflag, size = 0x4, scoped, tag = 'scoped memory for tpu_custom_call.1']
    #allocation13 [shape = 'u8[4096]{0}', space=vmem, size = 0x1000, scoped, tag = 'output window, operand 0, single buffered']
    %12 = vsyncpa [#allocation3], 0
    %13 = vsyncpa [#allocation6], 0
    %14 = vsyncpa [#allocation9], 0
    %15 = vsyncpa [#allocation12], 0
    %16 = vsyncpa [#allocation4], 0
    // Predicated region
    $region2: #{tpu_custom_call.1} parent=1 // pred_check
      _
    $region3: #{tpu_custom_call.1} parent=1 // pred_check_branch
      %18 = sbr.rel (0) target = $region5
    $region4: #{tpu_custom_call.1} parent=1 // pred_region
      %s20 = ssub.s32 128, 128
      %21 = vsyncadd [#allocation3], %s20
      %s23 = sshll.u32 [#allocation2], 4
      %s24 = int_to_ptr.vmem [resolvable:$true] %s23
      %26 = dma.hbm_to_vmem [thread:$0]  %s0, 128, %s24, [#allocation3]
    $region5: #{tpu_custom_call.1} parent=1 // pred_fallthru
      _
    // Predicated region
    $region6: #{tpu_custom_call.1} parent=1 // pred_check
      _
    $region7: #{tpu_custom_call.1} parent=1 // pred_check_branch
      %28 = sbr.rel (0) target = $region9
    $region8: #{tpu_custom_call.1} parent=1 // pred_region
      %s30 = ssub.s32 64, 64
      %31 = vsyncadd [#allocation6], %s30
      %s33 = sshll.u32 [#allocation5], 4
      %s34 = int_to_ptr.vmem [resolvable:$true] %s33
      %36 = dma.hbm_to_vmem [thread:$0]  %s1, 64, %s34, [#allocation6]
    $region9: #{tpu_custom_call.1} parent=1 // pred_fallthru
      _
    // Predicated region
    $region10: #{tpu_custom_call.1} parent=1 // pred_check
      _
    $region11: #{tpu_custom_call.1} parent=1 // pred_check_branch
      %38 = sbr.rel (0) target = $region13
    $region12: #{tpu_custom_call.1} parent=1 // pred_region
      %s40 = ssub.s32 1024, 1024
      %41 = vsyncadd [#allocation6], %s40
      %s42 = sshll.u32 [#allocation7], 4
      %s43 = int_to_ptr.vmem [resolvable:$true] %s42
      %48 = dma.hbm_to_vmem [thread:$0]  %s2, 1024, %s43, [#allocation6], 64, 64, 4
    $region13: #{tpu_custom_call.1} parent=1 // pred_fallthru
      _
    // Predicated region
    $region14: #{tpu_custom_call.1} parent=1 // pred_check
      _
    $region15: #{tpu_custom_call.1} parent=1 // pred_check_branch
      %50 = sbr.rel (0) target = $region17
    $region16: #{tpu_custom_call.1} parent=1 // pred_region
      %s52 = ssub.s32 1024, 1024
      %53 = vsyncadd [#allocation9], %s52
      %s54 = sshll.u32 [#allocation8], 4
      %s55 = int_to_ptr.vmem [resolvable:$true] %s54
      %60 = dma.hbm_to_vmem [thread:$0]  %s3, 1024, %s55, [#allocation9], 64, 64, 4
    $region17: #{tpu_custom_call.1} parent=1 // pred_fallthru
      _
    // Predicated region
    $region18: #{tpu_custom_call.1} parent=1 // pred_check
      _
    $region19: #{tpu_custom_call.1} parent=1 // pred_check_branch
      %62 = sbr.rel (0) target = $region21
    $region20: #{tpu_custom_call.1} parent=1 // pred_region
      %s64 = ssub.s32 1024, 1024
      %65 = vsyncadd [#allocation9], %s64
      %s66 = sshll.u32 [#allocation10], 4
      %s67 = int_to_ptr.vmem [resolvable:$true] %s66
      %72 = dma.hbm_to_vmem [thread:$0]  %s4, 1024, %s67, [#allocation9], 64, 64, 4
    $region21: #{tpu_custom_call.1} parent=1 // pred_fallthru
      _
    // Predicated region
    $region22: #{tpu_custom_call.1} parent=1 // pred_check
      _
    $region23: #{tpu_custom_call.1} parent=1 // pred_check_branch
      %74 = sbr.rel (0) target = $region25
    $region24: #{tpu_custom_call.1} parent=1 // pred_region
      %s76 = ssub.s32 1024, 1024
      %77 = vsyncadd [#allocation12], %s76
      %s78 = sshll.u32 [#allocation11], 4
      %s79 = int_to_ptr.vmem [resolvable:$true] %s78
      %84 = dma.hbm_to_vmem [thread:$0]  %s5, 1024, %s79, [#allocation12], 64, 64, 4
    $region25: #{tpu_custom_call.1} parent=1 // pred_fallthru
      _
    // Predicated region
    $region26: #{tpu_custom_call.1} parent=1 // pred_check
      _
    $region27: #{tpu_custom_call.1} parent=1 // pred_check_branch
      %86 = sbr.rel (0) target = $region29
    $region28: #{tpu_custom_call.1} parent=1 // pred_region
      _
    $region29: #{tpu_custom_call.1} parent=1 // pred_fallthru
      _
    // Predicated region
    $region30: #{tpu_custom_call.1} parent=1 // pred_check
      _
    $region31: #{tpu_custom_call.1} parent=1 // pred_check_branch
      %88 = sbr.rel (0) target = $region33
    $region32: #{tpu_custom_call.1} parent=1 // pred_region
      %89 = dma.done [#allocation3], 128
    $region33: #{tpu_custom_call.1} parent=1 // pred_fallthru
      _
    // Predicated region
    $region34: #{tpu_custom_call.1} parent=1 // pred_check
      _
    $region35: #{tpu_custom_call.1} parent=1 // pred_check_branch
      %91 = sbr.rel (0) target = $region37
    $region36: #{tpu_custom_call.1} parent=1 // pred_region
      %92 = dma.done [#allocation6], 64
    $region37: #{tpu_custom_call.1} parent=1 // pred_fallthru
      _
    // Predicated region
    $region38: #{tpu_custom_call.1} parent=1 // pred_check
      _
    $region39: #{tpu_custom_call.1} parent=1 // pred_check_branch
      %94 = sbr.rel (0) target = $region41
    $region40: #{tpu_custom_call.1} parent=1 // pred_region
      %95 = dma.done [#allocation6], 1024
    $region41: #{tpu_custom_call.1} parent=1 // pred_fallthru
      _
    // Predicated region
    $region42: #{tpu_custom_call.1} parent=1 // pred_check
      _
    $region43: #{tpu_custom_call.1} parent=1 // pred_check_branch
      %97 = sbr.rel (0) target = $region45
    $region44: #{tpu_custom_call.1} parent=1 // pred_region
      %98 = dma.done [#allocation9], 1024
    $region45: #{tpu_custom_call.1} parent=1 // pred_fallthru
      _
    // Predicated region
    $region46: #{tpu_custom_call.1} parent=1 // pred_check
      _
    $region47: #{tpu_custom_call.1} parent=1 // pred_check_branch
      %100 = sbr.rel (0) target = $region49
    $region48: #{tpu_custom_call.1} parent=1 // pred_region
      %101 = dma.done [#allocation9], 1024
    $region49: #{tpu_custom_call.1} parent=1 // pred_fallthru
      _
    // Predicated region
    $region50: #{tpu_custom_call.1} parent=1 // pred_check
      _
    $region51: #{tpu_custom_call.1} parent=1 // pred_check_branch
      %103 = sbr.rel (0) target = $region53
    $region52: #{tpu_custom_call.1} parent=1 // pred_region
      %104 = dma.done [#allocation12], 1024
    $region53: #{tpu_custom_call.1} parent=1 // pred_fallthru
      _
    %v106 = vld [vmem:[%s6] sm:$0xff]
    %v107 = vld [vmem:[#allocation2] sm:$0xff]
    %v108 = vpack.c.bf16 %v107, %v107
    %v109 = vld [vmem:[#allocation5] sm:$0xf]
    %v110 = vlaneseq
    %v111 = vshrl.u32 %v110, 7
    %v112 = vsub.s32 0, %v111
    %v113 = vrot.slane %v106, %v112
    %vm114 = vcmask 64512
    %v116 = vsel %vm114, %v108, 0
    %vm118 = vcmask 1043456
    %v120 = vsel %vm118, %v109, 0
    %122 = vmatprep.subr.bf16.mxu0 0
    %123 = vmatpush1.bf16.msra.mxu0 %v120
    %124 = vmatprep.subr.bf16.mxu0 0
    %125 = vmatpush1.bf16.msra.mxu0 0
    %126 = vmatprep.subr.bf16.mxu0 0
    %127 = vmatpush1.bf16.msra.mxu0 0
    %128 = vmatprep.subr.bf16.mxu0 0
    %129 = vmatpush1.bf16.msra.mxu0 0
    %130 = vmatprep.subr.bf16.mxu0 0
    %131 = vmatpush1.bf16.msra.mxu0 0
    %132 = vmatprep.subr.bf16.mxu0 0
    %133 = vmatpush1.bf16.msra.mxu0 0
    %134 = vmatprep.subr.bf16.mxu0 0
    %135 = vmatpush1.bf16.msra.mxu0 0
    %136 = vmatprep.subr.bf16.mxu0 0
    %137 = vmatpush1.bf16.msra.mxu0 0
    %138 = vmatprep.subr.bf16.mxu0 0
    %139 = vmatpush1.bf16.msra.mxu0 0
    %140 = vmatprep.subr.bf16.mxu0 0
    %141 = vmatpush1.bf16.msra.mxu0 0
    %142 = vmatprep.subr.bf16.mxu0 0
    %143 = vmatpush1.bf16.msra.mxu0 0
    %144 = vmatprep.subr.bf16.mxu0 0
    %145 = vmatpush1.bf16.msra.mxu0 0
    %146 = vmatprep.subr.bf16.mxu0 0
    %147 = vmatpush1.bf16.msra.mxu0 0
    %148 = vmatprep.subr.bf16.mxu0 0
    %149 = vmatpush1.bf16.msra.mxu0 0
    %150 = vmatprep.subr.bf16.mxu0 0
    %151 = vmatpush1.bf16.msra.mxu0 0
    %152 = vmatprep.subr.bf16.mxu0 0
    %153 = vmatpush1.bf16.msra.mxu0 0
    %154 = vmatprep.mubr.bf16.mxu0 0
    %155 = vmatmul.mubr.bf16.gmra.mrb[0].mxu0 %v116
    %v156 = vpop.f32.mrb[0].mxu0
    %v157 = vadd.f32 %v113, %v156
    %v158 = vpop.f32.mrb[0].mxu0
    %v159 = vpop.f32.mrb[0].mxu0
    %v160 = vpop.f32.mrb[0].mxu0
    %161 = vdwg.mxu0
    %v162 = vmax.f32 %v157, 0.0
    %v163 = vpack.c.bf16 %v162, %v162
    %v164 = vld [vmem:[#allocation7] sm:$0xf]
    %v165 = vld [vmem:[#allocation7 + $0x4] sm:$0xf]
    %v166 = vld [vmem:[#allocation7 + $0x8] sm:$0xf]
    %v167 = vld [vmem:[#allocation7 + $0xc] sm:$0xf]
    %v168 = vld [vmem:[#allocation7 + $0x10] sm:$0xf]
    %v169 = vld [vmem:[#allocation7 + $0x14] sm:$0xf]
    %v170 = vld [vmem:[#allocation7 + $0x18] sm:$0xf]
    %v171 = vld [vmem:[#allocation7 + $0x1c] sm:$0xf]
    %v172 = vld [vmem:[#allocation7 + $0x20] sm:$0xf]
    %v173 = vld [vmem:[#allocation7 + $0x24] sm:$0xf]
    %v174 = vld [vmem:[#allocation7 + $0x28] sm:$0xf]
    %v175 = vld [vmem:[#allocation7 + $0x2c] sm:$0xf]
    %v176 = vld [vmem:[#allocation7 + $0x30] sm:$0xf]
    %v177 = vld [vmem:[#allocation7 + $0x34] sm:$0xf]
    %v178 = vld [vmem:[#allocation7 + $0x38] sm:$0xf]
    %v179 = vld [vmem:[#allocation7 + $0x3c] sm:$0xf]
    %v180 = vlaneseq
    %v181 = vshrl.u32 %v180, 7
    %v182 = vsub.s32 1, %v181
    %v183 = vrot.slane %v106, %v182
    %v200 = vunpack.c.l.b16 %v164
    %v201 = vunpack.c.l.b16 %v165
    %v202 = vunpack.c.l.b16 %v166
    %v203 = vunpack.c.l.b16 %v167
    %v204 = vunpack.c.l.b16 %v168
    %v205 = vunpack.c.l.b16 %v169
    %v206 = vunpack.c.l.b16 %v170
    %v207 = vunpack.c.l.b16 %v171
    %v208 = vunpack.c.l.b16 %v172
    %v209 = vunpack.c.l.b16 %v173
    %v210 = vunpack.c.l.b16 %v174
    %v211 = vunpack.c.l.b16 %v175
    %v212 = vunpack.c.l.b16 %v176
    %v213 = vunpack.c.l.b16 %v177
    %v214 = vunpack.c.l.b16 %v178
    %v215 = vunpack.c.l.b16 %v179
    %v216 = vpack.c.b16 %v201, %v200
    %v217 = vpack.c.b16 %v203, %v202
    %v218 = vpack.c.b16 %v205, %v204
    %v219 = vpack.c.b16 %v207, %v206
    %v220 = vpack.c.b16 %v209, %v208
    %v221 = vpack.c.b16 %v211, %v210
    %v222 = vpack.c.b16 %v213, %v212
    %v223 = vpack.c.b16 %v215, %v214
    %232 = vmatprep.subr.bf16.mxu0 0
    %233 = vmatpush1.bf16.msra.mxu0 %v216
    %234 = vmatprep.subr.bf16.mxu0 0
    %235 = vmatpush1.bf16.msra.mxu0 %v217
    %236 = vmatprep.subr.bf16.mxu0 0
    %237 = vmatpush1.bf16.msra.mxu0 %v218
    %238 = vmatprep.subr.bf16.mxu0 0
    %239 = vmatpush1.bf16.msra.mxu0 %v219
    %240 = vmatprep.subr.bf16.mxu0 0
    %241 = vmatpush1.bf16.msra.mxu0 %v220
    %242 = vmatprep.subr.bf16.mxu0 0
    %243 = vmatpush1.bf16.msra.mxu0 %v221
    %244 = vmatprep.subr.bf16.mxu0 0
    %245 = vmatpush1.bf16.msra.mxu0 %v222
    %246 = vmatprep.subr.bf16.mxu0 0
    %247 = vmatpush1.bf16.msra.mxu0 %v223
    %248 = vmatprep.subr.bf16.mxu0 0
    %249 = vmatpush1.bf16.msra.mxu0 0
    %250 = vmatprep.subr.bf16.mxu0 0
    %251 = vmatpush1.bf16.msra.mxu0 0
    %252 = vmatprep.subr.bf16.mxu0 0
    %253 = vmatpush1.bf16.msra.mxu0 0
    %254 = vmatprep.subr.bf16.mxu0 0
    %255 = vmatpush1.bf16.msra.mxu0 0
    %256 = vmatprep.subr.bf16.mxu0 0
    %257 = vmatpush1.bf16.msra.mxu0 0
    %258 = vmatprep.subr.bf16.mxu0 0
    %259 = vmatpush1.bf16.msra.mxu0 0
    %260 = vmatprep.subr.bf16.mxu0 0
    %261 = vmatpush1.bf16.msra.mxu0 0
    %262 = vmatprep.subr.bf16.mxu0 0
    %263 = vmatpush1.bf16.msra.mxu0 0
    %264 = vmatprep.mubr.bf16.mxu0 0
    %265 = vmatmul.mubr.bf16.gmra.mrb[0].mxu0 %v163
    %v266 = vpop.f32.mrb[0].mxu0
    %v267 = vadd.f32 %v183, %v266
    %v268 = vpop.f32.mrb[0].mxu0
    %v269 = vpop.f32.mrb[0].mxu0
    %v270 = vpop.f32.mrb[0].mxu0
    %271 = vdwg.mxu0
    %v272 = vmax.f32 %v267, 0.0
    %v273 = vpack.c.bf16 %v272, %v272
    %v274 = vld [vmem:[#allocation8] sm:$0xf]
    %v275 = vld [vmem:[#allocation8 + $0x4] sm:$0xf]
    %v276 = vld [vmem:[#allocation8 + $0x8] sm:$0xf]
    %v277 = vld [vmem:[#allocation8 + $0xc] sm:$0xf]
    %v278 = vld [vmem:[#allocation8 + $0x10] sm:$0xf]
    %v279 = vld [vmem:[#allocation8 + $0x14] sm:$0xf]
    %v280 = vld [vmem:[#allocation8 + $0x18] sm:$0xf]
    %v281 = vld [vmem:[#allocation8 + $0x1c] sm:$0xf]
    %v282 = vld [vmem:[#allocation8 + $0x20] sm:$0xf]
    %v283 = vld [vmem:[#allocation8 + $0x24] sm:$0xf]
    %v284 = vld [vmem:[#allocation8 + $0x28] sm:$0xf]
    %v285 = vld [vmem:[#allocation8 + $0x2c] sm:$0xf]
    %v286 = vld [vmem:[#allocation8 + $0x30] sm:$0xf]
    %v287 = vld [vmem:[#allocation8 + $0x34] sm:$0xf]
    %v288 = vld [vmem:[#allocation8 + $0x38] sm:$0xf]
    %v289 = vld [vmem:[#allocation8 + $0x3c] sm:$0xf]
    %v290 = vlaneseq
    %v291 = vshrl.u32 %v290, 7
    %v292 = vsub.s32 2, %v291
    %v293 = vrot.slane %v106, %v292
    %v310 = vunpack.c.l.b16 %v274
    %v311 = vunpack.c.l.b16 %v275
    %v312 = vunpack.c.l.b16 %v276
    %v313 = vunpack.c.l.b16 %v277
    %v314 = vunpack.c.l.b16 %v278
    %v315 = vunpack.c.l.b16 %v279
    %v316 = vunpack.c.l.b16 %v280
    %v317 = vunpack.c.l.b16 %v281
    %v318 = vunpack.c.l.b16 %v282
    %v319 = vunpack.c.l.b16 %v283
    %v320 = vunpack.c.l.b16 %v284
    %v321 = vunpack.c.l.b16 %v285
    %v322 = vunpack.c.l.b16 %v286
    %v323 = vunpack.c.l.b16 %v287
    %v324 = vunpack.c.l.b16 %v288
    %v325 = vunpack.c.l.b16 %v289
    %v326 = vpack.c.b16 %v311, %v310
    %v327 = vpack.c.b16 %v313, %v312
    %v328 = vpack.c.b16 %v315, %v314
    %v329 = vpack.c.b16 %v317, %v316
    %v330 = vpack.c.b16 %v319, %v318
    %v331 = vpack.c.b16 %v321, %v320
    %v332 = vpack.c.b16 %v323, %v322
    %v333 = vpack.c.b16 %v325, %v324
    %342 = vmatprep.subr.bf16.mxu0 0
    %343 = vmatpush1.bf16.msra.mxu0 %v326
    %344 = vmatprep.subr.bf16.mxu0 0
    %345 = vmatpush1.bf16.msra.mxu0 %v327
    %346 = vmatprep.subr.bf16.mxu0 0
    %347 = vmatpush1.bf16.msra.mxu0 %v328
    %348 = vmatprep.subr.bf16.mxu0 0
    %349 = vmatpush1.bf16.msra.mxu0 %v329
    %350 = vmatprep.subr.bf16.mxu0 0
    %351 = vmatpush1.bf16.msra.mxu0 %v330
    %352 = vmatprep.subr.bf16.mxu0 0
    %353 = vmatpush1.bf16.msra.mxu0 %v331
    %354 = vmatprep.subr.bf16.mxu0 0
    %355 = vmatpush1.bf16.msra.mxu0 %v332
    %356 = vmatprep.subr.bf16.mxu0 0
    %357 = vmatpush1.bf16.msra.mxu0 %v333
    %358 = vmatprep.subr.bf16.mxu0 0
    %359 = vmatpush1.bf16.msra.mxu0 0
    %360 = vmatprep.subr.bf16.mxu0 0
    %361 = vmatpush1.bf16.msra.mxu0 0
    %362 = vmatprep.subr.bf16.mxu0 0
    %363 = vmatpush1.bf16.msra.mxu0 0
    %364 = vmatprep.subr.bf16.mxu0 0
    %365 = vmatpush1.bf16.msra.mxu0 0
    %366 = vmatprep.subr.bf16.mxu0 0
    %367 = vmatpush1.bf16.msra.mxu0 0
    %368 = vmatprep.subr.bf16.mxu0 0
    %369 = vmatpush1.bf16.msra.mxu0 0
    %370 = vmatprep.subr.bf16.mxu0 0
    %371 = vmatpush1.bf16.msra.mxu0 0
    %372 = vmatprep.subr.bf16.mxu0 0
    %373 = vmatpush1.bf16.msra.mxu0 0
    %374 = vmatprep.mubr.bf16.mxu0 0
    %375 = vmatmul.mubr.bf16.gmra.mrb[0].mxu0 %v273
    %v376 = vpop.f32.mrb[0].mxu0
    %v377 = vadd.f32 %v293, %v376
    %v378 = vpop.f32.mrb[0].mxu0
    %v379 = vpop.f32.mrb[0].mxu0
    %v380 = vpop.f32.mrb[0].mxu0
    %381 = vdwg.mxu0
    %v382 = vmax.f32 %v377, 0.0
    %v383 = vpack.c.bf16 %v382, %v382
    %v384 = vld [vmem:[#allocation10] sm:$0xf]
    %v385 = vld [vmem:[#allocation10 + $0x4] sm:$0xf]
    %v386 = vld [vmem:[#allocation10 + $0x8] sm:$0xf]
    %v387 = vld [vmem:[#allocation10 + $0xc] sm:$0xf]
    %v388 = vld [vmem:[#allocation10 + $0x10] sm:$0xf]
    %v389 = vld [vmem:[#allocation10 + $0x14] sm:$0xf]
    %v390 = vld [vmem:[#allocation10 + $0x18] sm:$0xf]
    %v391 = vld [vmem:[#allocation10 + $0x1c] sm:$0xf]
    %v392 = vld [vmem:[#allocation10 + $0x20] sm:$0xf]
    %v393 = vld [vmem:[#allocation10 + $0x24] sm:$0xf]
    %v394 = vld [vmem:[#allocation10 + $0x28] sm:$0xf]
    %v395 = vld [vmem:[#allocation10 + $0x2c] sm:$0xf]
    %v396 = vld [vmem:[#allocation10 + $0x30] sm:$0xf]
    %v397 = vld [vmem:[#allocation10 + $0x34] sm:$0xf]
    %v398 = vld [vmem:[#allocation10 + $0x38] sm:$0xf]
    %v399 = vld [vmem:[#allocation10 + $0x3c] sm:$0xf]
    %v400 = vlaneseq
    %v401 = vshrl.u32 %v400, 7
    %v402 = vsub.s32 3, %v401
    %v403 = vrot.slane %v106, %v402
    %v420 = vunpack.c.l.b16 %v384
    %v421 = vunpack.c.l.b16 %v385
    %v422 = vunpack.c.l.b16 %v386
    %v423 = vunpack.c.l.b16 %v387
    %v424 = vunpack.c.l.b16 %v388
    %v425 = vunpack.c.l.b16 %v389
    %v426 = vunpack.c.l.b16 %v390
    %v427 = vunpack.c.l.b16 %v391
    %v428 = vunpack.c.l.b16 %v392
    %v429 = vunpack.c.l.b16 %v393
    %v430 = vunpack.c.l.b16 %v394
    %v431 = vunpack.c.l.b16 %v395
    %v432 = vunpack.c.l.b16 %v396
    %v433 = vunpack.c.l.b16 %v397
    %v434 = vunpack.c.l.b16 %v398
    %v435 = vunpack.c.l.b16 %v399
    %v436 = vpack.c.b16 %v421, %v420
    %v437 = vpack.c.b16 %v423, %v422
    %v438 = vpack.c.b16 %v425, %v424
    %v439 = vpack.c.b16 %v427, %v426
    %v440 = vpack.c.b16 %v429, %v428
    %v441 = vpack.c.b16 %v431, %v430
    %v442 = vpack.c.b16 %v433, %v432
    %v443 = vpack.c.b16 %v435, %v434
    %452 = vmatprep.subr.bf16.mxu0 0
    %453 = vmatpush1.bf16.msra.mxu0 %v436
    %454 = vmatprep.subr.bf16.mxu0 0
    %455 = vmatpush1.bf16.msra.mxu0 %v437
    %456 = vmatprep.subr.bf16.mxu0 0
    %457 = vmatpush1.bf16.msra.mxu0 %v438
    %458 = vmatprep.subr.bf16.mxu0 0
    %459 = vmatpush1.bf16.msra.mxu0 %v439
    %460 = vmatprep.subr.bf16.mxu0 0
    %461 = vmatpush1.bf16.msra.mxu0 %v440
    %462 = vmatprep.subr.bf16.mxu0 0
    %463 = vmatpush1.bf16.msra.mxu0 %v441
    %464 = vmatprep.subr.bf16.mxu0 0
    %465 = vmatpush1.bf16.msra.mxu0 %v442
    %466 = vmatprep.subr.bf16.mxu0 0
    %467 = vmatpush1.bf16.msra.mxu0 %v443
    %468 = vmatprep.subr.bf16.mxu0 0
    %469 = vmatpush1.bf16.msra.mxu0 0
    %470 = vmatprep.subr.bf16.mxu0 0
    %471 = vmatpush1.bf16.msra.mxu0 0
    %472 = vmatprep.subr.bf16.mxu0 0
    %473 = vmatpush1.bf16.msra.mxu0 0
    %474 = vmatprep.subr.bf16.mxu0 0
    %475 = vmatpush1.bf16.msra.mxu0 0
    %476 = vmatprep.subr.bf16.mxu0 0
    %477 = vmatpush1.bf16.msra.mxu0 0
    %478 = vmatprep.subr.bf16.mxu0 0
    %479 = vmatpush1.bf16.msra.mxu0 0
    %480 = vmatprep.subr.bf16.mxu0 0
    %481 = vmatpush1.bf16.msra.mxu0 0
    %482 = vmatprep.subr.bf16.mxu0 0
    %483 = vmatpush1.bf16.msra.mxu0 0
    %484 = vmatprep.mubr.bf16.mxu0 0
    %485 = vmatmul.mubr.bf16.gmra.mrb[0].mxu0 %v383
    %v486 = vpop.f32.mrb[0].mxu0
    %v487 = vadd.f32 %v403, %v486
    %v488 = vpop.f32.mrb[0].mxu0
    %v489 = vpop.f32.mrb[0].mxu0
    %v490 = vpop.f32.mrb[0].mxu0
    %491 = vdwg.mxu0
    %v492 = vmax.f32 %v487, 0.0
    %v493 = vpack.c.bf16 %v492, %v492
    %v494 = vld [vmem:[#allocation11] sm:$0xf]
    %v495 = vld [vmem:[#allocation11 + $0x4] sm:$0xf]
    %v496 = vld [vmem:[#allocation11 + $0x8] sm:$0xf]
    %v497 = vld [vmem:[#allocation11 + $0xc] sm:$0xf]
    %v498 = vld [vmem:[#allocation11 + $0x10] sm:$0xf]
    %v499 = vld [vmem:[#allocation11 + $0x14] sm:$0xf]
    %v500 = vld [vmem:[#allocation11 + $0x18] sm:$0xf]
    %v501 = vld [vmem:[#allocation11 + $0x1c] sm:$0xf]
    %v502 = vld [vmem:[#allocation11 + $0x20] sm:$0xf]
    %v503 = vld [vmem:[#allocation11 + $0x24] sm:$0xf]
    %v504 = vld [vmem:[#allocation11 + $0x28] sm:$0xf]
    %v505 = vld [vmem:[#allocation11 + $0x2c] sm:$0xf]
    %v506 = vld [vmem:[#allocation11 + $0x30] sm:$0xf]
    %v507 = vld [vmem:[#allocation11 + $0x34] sm:$0xf]
    %v508 = vld [vmem:[#allocation11 + $0x38] sm:$0xf]
    %v509 = vld [vmem:[#allocation11 + $0x3c] sm:$0xf]
    %v510 = vlaneseq
    %v511 = vshrl.u32 %v510, 7
    %v512 = vsub.s32 4, %v511
    %v513 = vrot.slane %v106, %v512
    %v530 = vunpack.c.l.b16 %v494
    %v531 = vunpack.c.l.b16 %v495
    %v532 = vunpack.c.l.b16 %v496
    %v533 = vunpack.c.l.b16 %v497
    %v534 = vunpack.c.l.b16 %v498
    %v535 = vunpack.c.l.b16 %v499
    %v536 = vunpack.c.l.b16 %v500
    %v537 = vunpack.c.l.b16 %v501
    %v538 = vunpack.c.l.b16 %v502
    %v539 = vunpack.c.l.b16 %v503
    %v540 = vunpack.c.l.b16 %v504
    %v541 = vunpack.c.l.b16 %v505
    %v542 = vunpack.c.l.b16 %v506
    %v543 = vunpack.c.l.b16 %v507
    %v544 = vunpack.c.l.b16 %v508
    %v545 = vunpack.c.l.b16 %v509
    %v546 = vpack.c.b16 %v531, %v530
    %v547 = vpack.c.b16 %v533, %v532
    %v548 = vpack.c.b16 %v535, %v534
    %v549 = vpack.c.b16 %v537, %v536
    %v550 = vpack.c.b16 %v539, %v538
    %v551 = vpack.c.b16 %v541, %v540
    %v552 = vpack.c.b16 %v543, %v542
    %v553 = vpack.c.b16 %v545, %v544
    %562 = vmatprep.subr.bf16.mxu0 0
    %563 = vmatpush1.bf16.msra.mxu0 %v546
    %564 = vmatprep.subr.bf16.mxu0 0
    %565 = vmatpush1.bf16.msra.mxu0 %v547
    %566 = vmatprep.subr.bf16.mxu0 0
    %567 = vmatpush1.bf16.msra.mxu0 %v548
    %568 = vmatprep.subr.bf16.mxu0 0
    %569 = vmatpush1.bf16.msra.mxu0 %v549
    %570 = vmatprep.subr.bf16.mxu0 0
    %571 = vmatpush1.bf16.msra.mxu0 %v550
    %572 = vmatprep.subr.bf16.mxu0 0
    %573 = vmatpush1.bf16.msra.mxu0 %v551
    %574 = vmatprep.subr.bf16.mxu0 0
    %575 = vmatpush1.bf16.msra.mxu0 %v552
    %576 = vmatprep.subr.bf16.mxu0 0
    %577 = vmatpush1.bf16.msra.mxu0 %v553
    %578 = vmatprep.subr.bf16.mxu0 0
    %579 = vmatpush1.bf16.msra.mxu0 0
    %580 = vmatprep.subr.bf16.mxu0 0
    %581 = vmatpush1.bf16.msra.mxu0 0
    %582 = vmatprep.subr.bf16.mxu0 0
    %583 = vmatpush1.bf16.msra.mxu0 0
    %584 = vmatprep.subr.bf16.mxu0 0
    %585 = vmatpush1.bf16.msra.mxu0 0
    %586 = vmatprep.subr.bf16.mxu0 0
    %587 = vmatpush1.bf16.msra.mxu0 0
    %588 = vmatprep.subr.bf16.mxu0 0
    %589 = vmatpush1.bf16.msra.mxu0 0
    %590 = vmatprep.subr.bf16.mxu0 0
    %591 = vmatpush1.bf16.msra.mxu0 0
    %592 = vmatprep.subr.bf16.mxu0 0
    %593 = vmatpush1.bf16.msra.mxu0 0
    %594 = vmatprep.mubr.bf16.mxu0 0
    %595 = vmatmul.mubr.bf16.gmra.mrb[0].mxu0 %v493
    %v596 = vpop.f32.mrb[0].mxu0
    %v597 = vadd.f32 %v513, %v596
    %v598 = vpop.f32.mrb[0].mxu0
    %v599 = vpop.f32.mrb[0].mxu0
    %v600 = vpop.f32.mrb[0].mxu0
    %601 = vdwg.mxu0
    %602 = vst [vmem:[#allocation13] sm:$0xff] %v597
    // Predicated region
    $region54: #{tpu_custom_call.1} parent=1 // pred_check
      _
    $region55: #{tpu_custom_call.1} parent=1 // pred_check_branch
      %604 = sbr.rel (0) target = $region57
    $region56: #{tpu_custom_call.1} parent=1 // pred_region
      %s606 = ssub.s32 128, 128
      %607 = vsyncadd [#allocation4], %s606
      %s609 = sshll.u32 [#allocation13], 4
      %s610 = int_to_ptr.vmem [resolvable:$true] %s609
      %612 = dma.vmem_to_hbm [thread:$0]  %s610, 128, %s7, [#allocation4]
    $region57: #{tpu_custom_call.1} parent=1 // pred_fallthru
      _
    // Predicated region
    $region58: #{tpu_custom_call.1} parent=1 // pred_check
      _
    $region59: #{tpu_custom_call.1} parent=1 // pred_check_branch
      %614 = sbr.rel (0) target = $region61
    $region60: #{tpu_custom_call.1} parent=1 // pred_region
      %615 = dma.done [#allocation4], 128
    $region61: #{tpu_custom_call.1} parent=1 // pred_fallthru
      _
    %616 = vsyncpa [#allocation3], 1
    %617 = vsyncpa [#allocation6], 1
    %618 = vsyncpa [#allocation9], 1
    %619 = vsyncpa [#allocation12], 1
    %620 = vsyncpa [#allocation4], 1

</llo_original>
